<compile_context>
chip_gen: v7x
topology: tpu7x:2x2x1
jax: 0.10.0
libtpu: 0.0.40
codegen_flags: <defaults>
</compile_context>

<pallas_src>
import jax
import jax.numpy as jnp
from jax.experimental import pallas as pl
from jax.experimental.pallas import tpu as pltpu


def _onehot_gather_kernel(x_ref, oh_ref, o_ref):
    """out_tile[m, k] = x_tile[m, idx[k]] via three exact bf16 one-hot matmuls.

    x_ref:  (tm, D2) f32  VMEM tile (D2 on the lane axis)
    oh_ref: (D2, K)  bf16 VMEM one-hot selection matrix (resident, same block
                     every grid step; entries are exactly 0.0 / 1.0)
    o_ref:  (tm, K)  f32  VMEM tile (K on the lane axis)
    """
    x = x_ref[...]                                   # (tm, D2) f32
    oh = oh_ref[...]                                 # (D2, K)  bf16

    # Exact 3-way bf16 split of x: every residual is exactly representable in
    # f32, so x == x_hi + r1 and r1 == x_mid + r2 hold exactly.
    x_hi = x.astype(jnp.bfloat16)
    r1 = x - x_hi.astype(jnp.float32)
    x_mid = r1.astype(jnp.bfloat16)
    r2 = r1 - x_mid.astype(jnp.float32)
    x_lo = r2.astype(jnp.bfloat16)

    # Single-pass bf16 MXU matmuls; each one-hot column has exactly one 1.0, so
    # every dot result is the (exact) selected split component.
    hi = jnp.dot(x_hi, oh, preferred_element_type=jnp.float32)
    mid = jnp.dot(x_mid, oh, preferred_element_type=jnp.float32)
    lo = jnp.dot(x_lo, oh, preferred_element_type=jnp.float32)

    # Re-sum in the provably-exact order: (mid + lo) == r1 exactly (it is an
    # f32-representable value), then hi + r1 == x exactly.
    o_ref[...] = (hi + (mid + lo)).astype(o_ref.dtype)


def _round_up(v, mult):
    return -(-v // mult) * mult


def _vmem_budget():
    """Generation-aware scoped-VMEM limit and per-step block budget."""
    try:
        cap = int(pltpu.get_tpu_info().vmem_capacity_bytes)
    except Exception:
        cap = 64 * 1024 * 1024          # assume the smallest (v7x-like) VMEM
    vmem_limit = min(cap // 2, 64 * 1024 * 1024)   # 32 MiB on v7x, 64 MiB on v5e/v6e
    block_budget = vmem_limit // 2                  # headroom for Pallas bookkeeping
    return block_budget, vmem_limit


def _pick_m_tile(m, d2, k, block_budget_bytes):
    """Rows per grid step.

    Sized against the real double-buffered footprint (2x x-block + 2x out-block
    + resident one-hot), preferring multiples of 256 (MXU height) then 8
    (sublane).  Uses cdiv gridding, so tm need not divide M.  Forces >= 2 grid
    steps for M >= 512 so v7x's two TensorCores both get work.
    """
    bytes_per_row = 2 * 4 * (d2 + k)      # double-buffered f32 x block + out block
    resident = 2 * 2 * d2 * k             # bf16 one-hot block (conservatively x2)
    avail = max(block_budget_bytes - resident, 8 * bytes_per_row)
    tm = max(8, avail // bytes_per_row)

    if tm >= m:
        if m >= 512:
            # Whole problem fits in one block: split in two for megacore.
            return _round_up(pl.cdiv(m, 2), 8)
        return m                           # full-extent block is always legal
    if tm >= 256:
        return (tm // 256) * 256
    return (tm // 8) * 8


def index_select_dim2(x, indices):
    """Equivalent of torch.index_select(x, 2, indices) for 3-D float32 x."""
    d0, d1, d2 = x.shape
    (k,) = indices.shape
    assert d2 < 2**31, "indices must fit in int32 for TPU"
    m = d0 * d1

    # Reshape-only views: no HBM transpose passes on input or output.
    x2 = x.reshape(m, d2)
    idx32 = indices.astype(jnp.int32)

    # One-hot selection matrix built ONCE (hoisted out of the per-tile body).
    # Entries are exactly 0.0 / 1.0, so bf16 storage is lossless.
    onehot = (jnp.arange(d2, dtype=jnp.int32)[:, None] == idx32[None, :]).astype(
        jnp.bfloat16
    )                                                   # (D2, K)

    block_budget, vmem_limit = _vmem_budget()
    tm = _pick_m_tile(m, d2, k, block_budget)
    grid = (pl.cdiv(m, tm),)

    cost = pl.CostEstimate(
        flops=2 * 3 * m * d2 * k,                       # three bf16 passes
        transcendentals=0,
        bytes_accessed=4 * m * d2 + 4 * m * k + 2 * d2 * k,
    )

    out2 = pl.pallas_call(
        _onehot_gather_kernel,
        out_shape=jax.ShapeDtypeStruct((m, k), x.dtype),
        grid_spec=pltpu.PrefetchScalarGridSpec(
            num_scalar_prefetch=0,
            grid=grid,
            in_specs=[
                # Streaming M-tiles of x (ragged last block handled by Pallas).
                pl.BlockSpec((tm, d2), lambda i: (i, 0)),
                # Resident one-hot, same block every step (no per-step rebuild).
                # NOTE: pipeline_mode=pl.Buffered(3) on the x spec is a cheap
                # follow-up sweep if profiling ever shows exposed DMA.
                pl.BlockSpec((d2, k), lambda i: (0, 0)),
            ],
            out_specs=pl.BlockSpec((tm, k), lambda i: (i, 0)),
        ),
        compiler_params=pltpu.CompilerParams(
            dimension_semantics=("parallel",),          # row tiles independent
            vmem_limit_bytes=vmem_limit,
        ),
        cost_estimate=cost,
    )(x2, onehot)

    return out2.reshape(d0, d1, k)


if __name__ == "__main__":
    key = jax.random.PRNGKey(0)
    k_x, k_i = jax.random.split(key)

    # Small "dynamic" 3-D input matching the module's forward.
    d0, d1, d2 = 2, 4, 16
    k = 8
    x = jax.random.normal(k_x, (d0, d1, d2), dtype=jnp.float32)
    indices = jax.random.randint(k_i, (k,), 0, d2, dtype=jnp.int32)

    out = jax.block_until_ready(index_select_dim2(x, indices))
    ref = jnp.take(x, indices, axis=2)
    assert out.shape == (d0, d1, k), out.shape
    assert out.dtype == jnp.float32
    # Bit-exact gather (the exact bf16x3 split reconstructs f32 exactly).
    assert bool(jnp.array_equal(out, ref)), "mismatch vs index_select ref"

    # Second shape exercising the tiled, multi-step, megacore-shardable path
    # with a lane-dense (K = 128) output.
    d0b, d1b, d2b, kb = 4, 512, 256, 128
    xb = jax.random.normal(k_x, (d0b, d1b, d2b), dtype=jnp.float32)
    idxb = jax.random.randint(k_i, (kb,), 0, d2b, dtype=jnp.int32)
    outb = jax.block_until_ready(index_select_dim2(xb, idxb))
    refb = jnp.take(xb, idxb, axis=2)
    assert bool(jnp.array_equal(outb, refb)), "mismatch (tiled path)"

    print("KERNEL_OK")
</pallas_src>

<mosaic_0001>
module attributes {stable_mosaic.version = 11 : i64} {
  func.func @_onehot_gather_kernel(%arg0: i32, %arg1: memref<8x16xf32, #tpu.memory_space<vmem>>, %arg2: memref<16x8xbf16, #tpu.memory_space<vmem>>, %arg3: memref<8x8xf32, #tpu.memory_space<vmem>>) attributes {dimension_semantics = [#tpu.dimension_semantics<parallel>], iteration_bounds = array<i64: 1>, scalar_prefetch = 0 : i64, scratch_operands = 0 : i64, tpu.core_type = #tpu.core_type<tc>, window_params = [{transform_indices = @transform_0, window_bounds = array<i64: 8, 16>}, {pipeline_mode = #tpu.pipeline_mode<synchronous>, transform_indices = @transform_1, window_bounds = array<i64: 16, 8>}, {transform_indices = @transform_2, window_bounds = array<i64: 8, 8>}]} {
    %c0 = arith.constant 0 : index
    %c0_0 = arith.constant 0 : index
    %0 = vector.load %arg1[%c0, %c0_0] : memref<8x16xf32, #tpu.memory_space<vmem>>, vector<8x16xf32>
    %c0_1 = arith.constant 0 : index
    %c0_2 = arith.constant 0 : index
    %1 = vector.load %arg2[%c0_1, %c0_2] : memref<16x8xbf16, #tpu.memory_space<vmem>>, vector<16x8xbf16>
    %2 = arith.truncf %0 : vector<8x16xf32> to vector<8x16xbf16>
    %3 = arith.extf %2 : vector<8x16xbf16> to vector<8x16xf32>
    %4 = arith.subf %0, %3 : vector<8x16xf32>
    %5 = arith.truncf %4 : vector<8x16xf32> to vector<8x16xbf16>
    %6 = arith.extf %5 : vector<8x16xbf16> to vector<8x16xf32>
    %7 = arith.subf %4, %6 : vector<8x16xf32>
    %8 = arith.truncf %7 : vector<8x16xf32> to vector<8x16xbf16>
    %cst = arith.constant dense<0.000000e+00> : vector<8x8xf32>
    %9 = tpu.matmul %2, %1, %cst {dimension_numbers = #tpu.dot_dimension_numbers<[1], [0], [0], [1], [0, 0, 1, 1], [], []>} : vector<8x16xbf16>, vector<16x8xbf16>, vector<8x8xf32> -> vector<8x8xf32>
    %cst_3 = arith.constant dense<0.000000e+00> : vector<8x8xf32>
    %10 = tpu.matmul %5, %1, %cst_3 {dimension_numbers = #tpu.dot_dimension_numbers<[1], [0], [0], [1], [0, 0, 1, 1], [], []>} : vector<8x16xbf16>, vector<16x8xbf16>, vector<8x8xf32> -> vector<8x8xf32>
    %cst_4 = arith.constant dense<0.000000e+00> : vector<8x8xf32>
    %11 = tpu.matmul %8, %1, %cst_4 {dimension_numbers = #tpu.dot_dimension_numbers<[1], [0], [0], [1], [0, 0, 1, 1], [], []>} : vector<8x16xbf16>, vector<16x8xbf16>, vector<8x8xf32> -> vector<8x8xf32>
    %12 = arith.addf %10, %11 : vector<8x8xf32>
    %13 = arith.addf %9, %12 : vector<8x8xf32>
    %c0_5 = arith.constant 0 : index
    %c0_6 = arith.constant 0 : index
    %14 = vector.load %arg3[%c0_5, %c0_6] : memref<8x8xf32, #tpu.memory_space<vmem>>, vector<8x8xf32>
    tpu.vector_store %arg3[%c0_5, %c0_6], %13 {strides = array<i32>} : memref<8x8xf32, #tpu.memory_space<vmem>>, vector<8x8xf32>,
    return
  }
  func.func @transform_0(%arg0: i32) -> (i32, i32) {
    %c0_i32 = arith.constant 0 : i32
    %c0_i32_0 = arith.constant 0 : i32
    return %arg0, %c0_i32 : i32, i32
  }
  func.func @transform_1(%arg0: i32) -> (i32, i32) {
    %c0_i32 = arith.constant 0 : i32
    %c0_i32_0 = arith.constant 0 : i32
    %c0_i32_1 = arith.constant 0 : i32
    return %c0_i32, %c0_i32_0 : i32, i32
  }
  func.func @transform_2(%arg0: i32) -> (i32, i32) {
    %c0_i32 = arith.constant 0 : i32
    %c0_i32_0 = arith.constant 0 : i32
    return %arg0, %c0_i32 : i32, i32
  }
}

</mosaic_0001>

<llo_original>
// kernel: tpu_custom_call.1
$region0: #{tpu_custom_call.1}
  #allocation0 [shape = 'u32[]', space=smem, size = 0x4, offset = 0x4, fixed_abs, tag = 'smem constant byte address 0x4 - core index']
  #allocation1 [shape = 'u32[144,128]{1,0:T(1,128)}', space=vmem, size = 0x12000, scoped, tag = 'internal scratch']
  %s0 = inlined_call_operand.vmem [shape: f32[8,16], index: 0, kind: input, shape index: {}]
  %s1 = inlined_call_operand.vmem [shape: bf16[16,8], index: 1, kind: input, shape index: {}]
  %s2 = inlined_call_operand.hbm [shape: f32[8,8], index: 2, kind: output, shape index: {}]
  %s3 = sld [smem:[#allocation0]]
  $region18: #{tpu_custom_call.1} parent=0
    _
  %s5 = ssub.s32 1, %s3
  %s6 = scalar_select 0, %s5, %s3
  $region1: #{tpu_custom_call.1} parent=0
    #allocation2 [shape = 'u8[4096]{0}', space=vmem, size = 0x1000, scoped, tag = 'output window, operand 0, single buffered']
    #allocation3 [shape = 's32[1]{0}', space=sflag, size = 0x4, scoped, tag = 'scoped memory for tpu_custom_call.1']
    %7 = vsyncpa [#allocation3], 0
    // Predicated region
    $region2: #{tpu_custom_call.1} parent=1 // pred_check
      _
    $region3: #{tpu_custom_call.1} parent=1 // pred_check_branch
      %9 = sbr.rel (0) target = $region5
    $region4: #{tpu_custom_call.1} parent=1 // pred_region
      _
    $region5: #{tpu_custom_call.1} parent=1 // pred_fallthru
      _
    // Predicated region
    $region6: #{tpu_custom_call.1} parent=1 // pred_check
      _
    $region7: #{tpu_custom_call.1} parent=1 // pred_check_branch
      %11 = sbr.rel (0) target = $region9
    $region8: #{tpu_custom_call.1} parent=1 // pred_region
      _
    $region9: #{tpu_custom_call.1} parent=1 // pred_fallthru
      _
    %v13 = vld [vmem:[%s0] sm:$0xff]
    %v14 = vld [vmem:[%s1] sm:$0xf]
    %v15 = vld [vmem:[%s1 + $0x4] sm:$0xf]
    %v16 = vpack.c.bf16 %v13, %v13
    %v17 = vunpack.c.l.bf16 %v16
    %v18 = vsub.f32 %v13, %v17
    %v19 = vpack.c.bf16 %v18, %v18
    %v20 = vunpack.c.l.bf16 %v19
    %v21 = vsub.f32 %v18, %v20
    %v22 = vpack.c.bf16 %v21, %v21
    %v25 = vunpack.c.l.b16 %v14
    %v26 = vunpack.c.l.b16 %v15
    %v27 = vpack.c.b16 %v26, %v25
    %vm29 = vcmask 130048
    %v31 = vsel %vm29, %v22, 0
    %33 = vmatprep.subr.bf16.mxu0 0
    %34 = vmatpush1.bf16.msra.mxu0 %v27
    %35 = vmatprep.subr.bf16.mxu0 0
    %36 = vmatpush1.bf16.msra.mxu0 0
    %37 = vmatprep.subr.bf16.mxu0 0
    %38 = vmatpush1.bf16.msra.mxu0 0
    %39 = vmatprep.subr.bf16.mxu0 0
    %40 = vmatpush1.bf16.msra.mxu0 0
    %41 = vmatprep.subr.bf16.mxu0 0
    %42 = vmatpush1.bf16.msra.mxu0 0
    %43 = vmatprep.subr.bf16.mxu0 0
    %44 = vmatpush1.bf16.msra.mxu0 0
    %45 = vmatprep.subr.bf16.mxu0 0
    %46 = vmatpush1.bf16.msra.mxu0 0
    %47 = vmatprep.subr.bf16.mxu0 0
    %48 = vmatpush1.bf16.msra.mxu0 0
    %49 = vmatprep.subr.bf16.mxu0 0
    %50 = vmatpush1.bf16.msra.mxu0 0
    %51 = vmatprep.subr.bf16.mxu0 0
    %52 = vmatpush1.bf16.msra.mxu0 0
    %53 = vmatprep.subr.bf16.mxu0 0
    %54 = vmatpush1.bf16.msra.mxu0 0
    %55 = vmatprep.subr.bf16.mxu0 0
    %56 = vmatpush1.bf16.msra.mxu0 0
    %57 = vmatprep.subr.bf16.mxu0 0
    %58 = vmatpush1.bf16.msra.mxu0 0
    %59 = vmatprep.subr.bf16.mxu0 0
    %60 = vmatpush1.bf16.msra.mxu0 0
    %61 = vmatprep.subr.bf16.mxu0 0
    %62 = vmatpush1.bf16.msra.mxu0 0
    %63 = vmatprep.subr.bf16.mxu0 0
    %64 = vmatpush1.bf16.msra.mxu0 0
    %65 = vmatprep.mubr.bf16.mxu0 0
    %66 = vmatmul.mubr.bf16.gmra.mrb[0].mxu0 %v31
    %v67 = vpop.f32.mrb[0].mxu0
    %v68 = vadd.f32 0.0, %v67
    %v69 = vpop.f32.mrb[0].mxu0
    %v70 = vpop.f32.mrb[0].mxu0
    %v71 = vpop.f32.mrb[0].mxu0
    %72 = vdwg.mxu0
    %v74 = vsel %vm29, %v19, 0
    %76 = vmatprep.subr.bf16.mxu0 0
    %77 = vmatpush1.bf16.msra.mxu0 %v27
    %78 = vmatprep.subr.bf16.mxu0 0
    %79 = vmatpush1.bf16.msra.mxu0 0
    %80 = vmatprep.subr.bf16.mxu0 0
    %81 = vmatpush1.bf16.msra.mxu0 0
    %82 = vmatprep.subr.bf16.mxu0 0
    %83 = vmatpush1.bf16.msra.mxu0 0
    %84 = vmatprep.subr.bf16.mxu0 0
    %85 = vmatpush1.bf16.msra.mxu0 0
    %86 = vmatprep.subr.bf16.mxu0 0
    %87 = vmatpush1.bf16.msra.mxu0 0
    %88 = vmatprep.subr.bf16.mxu0 0
    %89 = vmatpush1.bf16.msra.mxu0 0
    %90 = vmatprep.subr.bf16.mxu0 0
    %91 = vmatpush1.bf16.msra.mxu0 0
    %92 = vmatprep.subr.bf16.mxu0 0
    %93 = vmatpush1.bf16.msra.mxu0 0
    %94 = vmatprep.subr.bf16.mxu0 0
    %95 = vmatpush1.bf16.msra.mxu0 0
    %96 = vmatprep.subr.bf16.mxu0 0
    %97 = vmatpush1.bf16.msra.mxu0 0
    %98 = vmatprep.subr.bf16.mxu0 0
    %99 = vmatpush1.bf16.msra.mxu0 0
    %100 = vmatprep.subr.bf16.mxu0 0
    %101 = vmatpush1.bf16.msra.mxu0 0
    %102 = vmatprep.subr.bf16.mxu0 0
    %103 = vmatpush1.bf16.msra.mxu0 0
    %104 = vmatprep.subr.bf16.mxu0 0
    %105 = vmatpush1.bf16.msra.mxu0 0
    %106 = vmatprep.subr.bf16.mxu0 0
    %107 = vmatpush1.bf16.msra.mxu0 0
    %108 = vmatprep.mubr.bf16.mxu0 0
    %109 = vmatmul.mubr.bf16.gmra.mrb[0].mxu0 %v74
    %v110 = vpop.f32.mrb[0].mxu0
    %v111 = vadd.f32 %v68, %v110
    %v112 = vpop.f32.mrb[0].mxu0
    %v113 = vpop.f32.mrb[0].mxu0
    %v114 = vpop.f32.mrb[0].mxu0
    %115 = vdwg.mxu0
    %v117 = vsel %vm29, %v16, 0
    %119 = vmatprep.subr.bf16.mxu0 0
    %120 = vmatpush1.bf16.msra.mxu0 %v27
    %121 = vmatprep.subr.bf16.mxu0 0
    %122 = vmatpush1.bf16.msra.mxu0 0
    %123 = vmatprep.subr.bf16.mxu0 0
    %124 = vmatpush1.bf16.msra.mxu0 0
    %125 = vmatprep.subr.bf16.mxu0 0
    %126 = vmatpush1.bf16.msra.mxu0 0
    %127 = vmatprep.subr.bf16.mxu0 0
    %128 = vmatpush1.bf16.msra.mxu0 0
    %129 = vmatprep.subr.bf16.mxu0 0
    %130 = vmatpush1.bf16.msra.mxu0 0
    %131 = vmatprep.subr.bf16.mxu0 0
    %132 = vmatpush1.bf16.msra.mxu0 0
    %133 = vmatprep.subr.bf16.mxu0 0
    %134 = vmatpush1.bf16.msra.mxu0 0
    %135 = vmatprep.subr.bf16.mxu0 0
    %136 = vmatpush1.bf16.msra.mxu0 0
    %137 = vmatprep.subr.bf16.mxu0 0
    %138 = vmatpush1.bf16.msra.mxu0 0
    %139 = vmatprep.subr.bf16.mxu0 0
    %140 = vmatpush1.bf16.msra.mxu0 0
    %141 = vmatprep.subr.bf16.mxu0 0
    %142 = vmatpush1.bf16.msra.mxu0 0
    %143 = vmatprep.subr.bf16.mxu0 0
    %144 = vmatpush1.bf16.msra.mxu0 0
    %145 = vmatprep.subr.bf16.mxu0 0
    %146 = vmatpush1.bf16.msra.mxu0 0
    %147 = vmatprep.subr.bf16.mxu0 0
    %148 = vmatpush1.bf16.msra.mxu0 0
    %149 = vmatprep.subr.bf16.mxu0 0
    %150 = vmatpush1.bf16.msra.mxu0 0
    %151 = vmatprep.mubr.bf16.mxu0 0
    %152 = vmatmul.mubr.bf16.gmra.mrb[0].mxu0 %v117
    %v153 = vpop.f32.mrb[0].mxu0
    %v154 = vadd.f32 %v111, %v153
    %v155 = vpop.f32.mrb[0].mxu0
    %v156 = vpop.f32.mrb[0].mxu0
    %v157 = vpop.f32.mrb[0].mxu0
    %158 = vdwg.mxu0
    %vm159 = vcmask 64512
    %160 = vst.msk [vmem:[#allocation2] sm:$0xff] %vm159, %v154
    // Predicated region
    $region10: #{tpu_custom_call.1} parent=1 // pred_check
      _
    $region11: #{tpu_custom_call.1} parent=1 // pred_check_branch
      %162 = sbr.rel (0) target = $region13
    $region12: #{tpu_custom_call.1} parent=1 // pred_region
      %s164 = ssub.s32 128, 128
      %165 = vsyncadd [#allocation3], %s164
      %s167 = sshll.u32 [#allocation2], 4
      %s168 = int_to_ptr.vmem [resolvable:$true] %s167
      %170 = dma.vmem_to_hbm [thread:$0]  %s168, 128, %s2, [#allocation3]
    $region13: #{tpu_custom_call.1} parent=1 // pred_fallthru
      _
    // Predicated region
    $region14: #{tpu_custom_call.1} parent=1 // pred_check
      _
    $region15: #{tpu_custom_call.1} parent=1 // pred_check_branch
      %172 = sbr.rel (0) target = $region17
    $region16: #{tpu_custom_call.1} parent=1 // pred_region
      %173 = dma.done [#allocation3], 128
    $region17: #{tpu_custom_call.1} parent=1 // pred_fallthru
      _
    %174 = vsyncpa [#allocation3], 1

</llo_original>
